<compile_context>
chip_gen: v6e
topology: v6e:2x2x1
jax: 0.10.0
libtpu: 0.0.40
codegen_flags: <defaults>
</compile_context>

<pallas_src>
import functools

import jax
import jax.numpy as jnp
from jax.experimental import pallas as pl
from jax.experimental.pallas import tpu as pltpu


def _change_sim_kernel(x1_ref, x2_ref, lab_ref, out_ref, acc_ref, *,
                       hw, needs_mask):
    # x1_ref/x2_ref: (1, C, TS, 128) float   lab_ref: (1, 1, TS, 128) int/float
    # out_ref:       (1, 1, 128) f32         acc_ref: (TS, 128) f32 scratch
    j = pl.program_id(1)
    nj = pl.num_programs(1)

    @pl.when(j == 0)
    def _():
        acc_ref[...] = jnp.zeros_like(acc_ref)

    x1 = x1_ref[0].astype(jnp.float32)          # (C, TS, 128)
    x2 = x2_ref[0].astype(jnp.float32)          # (C, TS, 128)
    ts = x1.shape[1]

    # Stable exp; the softmax denominator cancels inside the cosine, so we
    # never divide per pixel.  Channel reduction = elementwise max/add over C
    # full vregs (VPU), no cross-lane work.
    e1 = jnp.exp(x1 - jnp.max(x1, axis=0))      # (C, TS, 128)
    e2 = jnp.exp(x2 - jnp.max(x2, axis=0))      # (C, TS, 128)

    dot = jnp.sum(e1 * e2, axis=0)              # (TS, 128)
    s1 = jnp.sum(e1 * e1, axis=0)               # (TS, 128)
    s2 = jnp.sum(e2 * e2, axis=0)               # (TS, 128)
    # s1, s2 >= 1 (exp(0) term after max-shift) -> no eps clamp needed.
    cos = dot * jax.lax.rsqrt(s1 * s2)          # (TS, 128)

    changed = lab_ref[0, 0] != 0                # (TS, 128) bool
    # CosineEmbeddingLoss, margin=0:
    #   target=+1 (unchanged): 1 - cos ;  target=-1 (changed): max(0, cos)
    per_px = jnp.where(changed, jnp.maximum(cos, 0.0), 1.0 - cos)

    if needs_mask:
        # Only the last spatial chunk can contain out-of-range pixels.
        @pl.when(j == nj - 1)
        def _():
            sub = jax.lax.broadcasted_iota(jnp.int32, (ts, 128), 0)
            lane = jax.lax.broadcasted_iota(jnp.int32, (ts, 128), 1)
            idx = j * (ts * 128) + sub * 128 + lane
            # Keep this a select: padded lanes may hold inf/NaN from exp/rsqrt.
            acc_ref[...] += jnp.where(idx < hw, per_px, 0.0)

        @pl.when(j != nj - 1)
        def _():
            acc_ref[...] += per_px
    else:
        acc_ref[...] += per_px

    @pl.when(j == nj - 1)
    def _():
        total = jnp.sum(acc_ref[...])
        out_ref[...] = jnp.full(out_ref.shape, total, dtype=out_ref.dtype)


def _pick_tile_rows(n_rows, bytes_per_px, target_block_bytes):
    """Rows of 128 pixels per grid step, sized for ~target_block_bytes input."""
    target_px = max(1, target_block_bytes // bytes_per_px)
    ts = (target_px // 128 // 32) * 32      # multiple of 32: safe for any dtype
    ts = max(ts, 32)
    ts = min(ts, 512)                       # VMEM cap (double-buffered inputs)
    if ts >= n_rows:
        ts = n_rows                         # full-dim block is always legal
    return ts


@functools.partial(jax.jit, static_argnames=("target_block_bytes",))
def change_similarity(x1, x2, label_change, *, target_block_bytes=1 << 20):
    """Pallas implementation of ChangeSimilarity.forward (reduction='mean').

    x1, x2:        [B, C, H, W] float logits (f32 or bf16)
    label_change:  [B, H, W]    change mask (any numeric dtype; nonzero = changed)
    """
    b, c, h, w = x1.shape
    hw = h * w
    n_rows = pl.cdiv(hw, 128)
    hw_pad = n_rows * 128

    # Zero-copy layout change (when hw % 128 == 0): merge H,W and split into
    # rows of 128 lanes so pixels fill both sublanes and lanes of each vreg.
    x1r = x1.reshape(b, c, hw)
    x2r = x2.reshape(b, c, hw)
    lab = label_change.reshape(b, 1, hw)
    if lab.dtype == jnp.bool_:
        lab = lab.astype(jnp.int32)         # robust lowering; ints pass through

    if hw_pad != hw:
        pad = ((0, 0), (0, 0), (0, hw_pad - hw))
        x1r = jnp.pad(x1r, pad)
        x2r = jnp.pad(x2r, pad)
        lab = jnp.pad(lab, pad)

    x1r = x1r.reshape(b, c, n_rows, 128)
    x2r = x2r.reshape(b, c, n_rows, 128)
    lab = lab.reshape(b, 1, n_rows, 128)

    bytes_per_px = 2 * c * x1.dtype.itemsize + lab.dtype.itemsize
    ts = _pick_tile_rows(n_rows, bytes_per_px, target_block_bytes)
    n_chunks = pl.cdiv(n_rows, ts)
    needs_mask = (n_chunks * ts * 128) != hw

    kernel = functools.partial(_change_sim_kernel, hw=hw, needs_mask=needs_mask)

    out = pl.pallas_call(
        kernel,
        out_shape=jax.ShapeDtypeStruct((b, 1, 128), jnp.float32),
        grid_spec=pltpu.PrefetchScalarGridSpec(
            num_scalar_prefetch=0,
            grid=(b, n_chunks),
            in_specs=[
                pl.BlockSpec((1, c, ts, 128), lambda i, j: (i, 0, j, 0)),
                pl.BlockSpec((1, c, ts, 128), lambda i, j: (i, 0, j, 0)),
                pl.BlockSpec((1, 1, ts, 128), lambda i, j: (i, 0, j, 0)),
            ],
            out_specs=pl.BlockSpec((1, 1, 128), lambda i, j: (i, 0, 0)),
            scratch_shapes=[pltpu.VMEM((ts, 128), jnp.float32)],
        ),
        compiler_params=pltpu.CompilerParams(
            dimension_semantics=("parallel", "arbitrary")),
    )(x1r, x2r, lab)

    # One broadcast partial sum per batch row; lane 0 carries the value.
    total = jnp.sum(out[:, 0, 0])
    return total / jnp.float32(b * h * w)
    # TODO(synk): only reduction='mean' (the module default) is implemented.
    # TODO(synk): for B==1 on v7x, the spatial axis could also be split
    # "parallel" across the two TensorCores (two partial-sum output blocks).


def _reference_loss(x1, x2, label_change):
    """Pure-JAX mirror of the PyTorch forward (CosineEmbeddingLoss, margin=0)."""
    b, c, h, w = x1.shape
    p1 = jax.nn.softmax(x1.astype(jnp.float32), axis=1)
    p2 = jax.nn.softmax(x2.astype(jnp.float32), axis=1)
    p1 = jnp.transpose(p1, (0, 2, 3, 1)).reshape(b * h * w, c)
    p2 = jnp.transpose(p2, (0, 2, 3, 1)).reshape(b * h * w, c)
    changed = (label_change != 0).reshape(b * h * w)
    eps = 1e-8
    denom = jnp.maximum(
        jnp.linalg.norm(p1, axis=-1) * jnp.linalg.norm(p2, axis=-1), eps)
    cos = jnp.sum(p1 * p2, axis=-1) / denom
    loss = jnp.where(changed, jnp.maximum(cos, 0.0), 1.0 - cos)
    return jnp.mean(loss)


if __name__ == "__main__":
    key = jax.random.PRNGKey(0)
    k1, k2, k3, k4, k5, k6 = jax.random.split(key, 6)

    # Case 1: typical small shape, f32 logits, native int32 change mask.
    B, C, H, W = 2, 4, 16, 16
    x1 = jax.random.normal(k1, (B, C, H, W), dtype=jnp.float32)
    x2 = jax.random.normal(k2, (B, C, H, W), dtype=jnp.float32)
    label_change = jax.random.bernoulli(k3, 0.3, (B, H, W)).astype(jnp.int32)

    out = jax.block_until_ready(change_similarity(x1, x2, label_change))
    ref = _reference_loss(x1, x2, label_change)
    assert jnp.allclose(out, ref, atol=1e-5, rtol=1e-5), (out, ref)

    # Case 2: odd spatial size (exercises padding + tail mask), B=1, bool mask.
    B2, C2, H2, W2 = 1, 6, 13, 19
    y1 = jax.random.normal(k4, (B2, C2, H2, W2), dtype=jnp.float32)
    y2 = jax.random.normal(k5, (B2, C2, H2, W2), dtype=jnp.float32)
    lab2 = jax.random.bernoulli(k6, 0.5, (B2, H2, W2))

    out2 = jax.block_until_ready(change_similarity(y1, y2, lab2))
    ref2 = _reference_loss(y1, y2, lab2)
    assert jnp.allclose(out2, ref2, atol=1e-5, rtol=1e-5), (out2, ref2)

    print("KERNEL_OK")
</pallas_src>

<mosaic_0001>
module attributes {stable_mosaic.version = 11 : i64} {
  func.func @_change_sim_kernel(%arg0: i32, %arg1: i32, %arg2: memref<1x4x2x128xf32, #tpu.memory_space<vmem>>, %arg3: memref<1x4x2x128xf32, #tpu.memory_space<vmem>>, %arg4: memref<1x1x2x128xi32, #tpu.memory_space<vmem>>, %arg5: memref<1x1x128xf32, #tpu.memory_space<vmem>>, %arg6: memref<2x128xf32, #tpu.memory_space<vmem>>) attributes {dimension_semantics = [#tpu.dimension_semantics<parallel>, #tpu.dimension_semantics<arbitrary>], iteration_bounds = array<i64: 2, 1>, scalar_prefetch = 0 : i64, scratch_operands = 1 : i64, tpu.core_type = #tpu.core_type<tc>, window_params = [{transform_indices = @transform_0, window_bounds = array<i64: 1, 4, 2, 128>}, {transform_indices = @transform_1, window_bounds = array<i64: 1, 4, 2, 128>}, {transform_indices = @transform_2, window_bounds = array<i64: 1, 1, 2, 128>}, {transform_indices = @transform_3, window_bounds = array<i64: 1, 1, 128>}]} {
    %c0_i32 = arith.constant 0 : i32
    %0 = arith.cmpi eq, %arg1, %c0_i32 : i32
    %1 = arith.extui %0 : i1 to i32
    %c0_i32_0 = arith.constant 0 : i32
    %2 = arith.cmpi ne, %1, %c0_i32_0 : i32
    scf.if %2 {
      %cst_25 = arith.constant 0.000000e+00 : f32
      %41 = vector.broadcast %cst_25 : f32 to vector<2x128xf32>
      %c0_26 = arith.constant 0 : index
      %c0_27 = arith.constant 0 : index
      %42 = vector.load %arg6[%c0_26, %c0_27] : memref<2x128xf32, #tpu.memory_space<vmem>>, vector<2x128xf32>
      tpu.vector_store %arg6[%c0_26, %c0_27], %41 {strides = array<i32>} : memref<2x128xf32, #tpu.memory_space<vmem>>, vector<2x128xf32>,
    } else {
    }
    %c0 = arith.constant 0 : index
    %c0_1 = arith.constant 0 : index
    %c0_2 = arith.constant 0 : index
    %c0_3 = arith.constant 0 : index
    %3 = vector.load %arg2[%c0, %c0_1, %c0_2, %c0_3] : memref<1x4x2x128xf32, #tpu.memory_space<vmem>>, vector<1x4x2x128xf32>
    %4 = vector.shape_cast %3 : vector<1x4x2x128xf32> to vector<4x2x128xf32>
    %c0_4 = arith.constant 0 : index
    %c0_5 = arith.constant 0 : index
    %c0_6 = arith.constant 0 : index
    %c0_7 = arith.constant 0 : index
    %5 = vector.load %arg3[%c0_4, %c0_5, %c0_6, %c0_7] : memref<1x4x2x128xf32, #tpu.memory_space<vmem>>, vector<1x4x2x128xf32>
    %6 = vector.shape_cast %5 : vector<1x4x2x128xf32> to vector<4x2x128xf32>
    %cst = arith.constant dense<0xFF800000> : vector<2x128xf32>
    %7 = vector.multi_reduction <maximumf>, %4, %cst [0] : vector<4x2x128xf32> to vector<2x128xf32>
    %8 = vector.shape_cast %7 : vector<2x128xf32> to vector<1x2x128xf32>
    %9 = vector.broadcast %8 : vector<1x2x128xf32> to vector<4x2x128xf32>
    %10 = arith.subf %4, %9 : vector<4x2x128xf32>
    %11 = math.exp %10 : vector<4x2x128xf32>
    %cst_8 = arith.constant dense<0xFF800000> : vector<2x128xf32>
    %12 = vector.multi_reduction <maximumf>, %6, %cst_8 [0] : vector<4x2x128xf32> to vector<2x128xf32>
    %13 = vector.shape_cast %12 : vector<2x128xf32> to vector<1x2x128xf32>
    %14 = vector.broadcast %13 : vector<1x2x128xf32> to vector<4x2x128xf32>
    %15 = arith.subf %6, %14 : vector<4x2x128xf32>
    %16 = math.exp %15 : vector<4x2x128xf32>
    %17 = arith.mulf %11, %16 : vector<4x2x128xf32>
    %cst_9 = arith.constant dense<0.000000e+00> : vector<2x128xf32>
    %18 = vector.multi_reduction <add>, %17, %cst_9 [0] : vector<4x2x128xf32> to vector<2x128xf32>
    %19 = arith.mulf %11, %11 : vector<4x2x128xf32>
    %cst_10 = arith.constant dense<0.000000e+00> : vector<2x128xf32>
    %20 = vector.multi_reduction <add>, %19, %cst_10 [0] : vector<4x2x128xf32> to vector<2x128xf32>
    %21 = arith.mulf %16, %16 : vector<4x2x128xf32>
    %cst_11 = arith.constant dense<0.000000e+00> : vector<2x128xf32>
    %22 = vector.multi_reduction <add>, %21, %cst_11 [0] : vector<4x2x128xf32> to vector<2x128xf32>
    %23 = arith.mulf %20, %22 : vector<2x128xf32>
    %24 = math.rsqrt %23 : vector<2x128xf32>
    %25 = arith.mulf %18, %24 : vector<2x128xf32>
    %c0_12 = arith.constant 0 : index
    %c0_13 = arith.constant 0 : index
    %c0_14 = arith.constant 0 : index
    %c0_15 = arith.constant 0 : index
    %26 = vector.load %arg4[%c0_12, %c0_13, %c0_14, %c0_15] : memref<1x1x2x128xi32, #tpu.memory_space<vmem>>, vector<1x1x2x128xi32>
    %27 = vector.shape_cast %26 : vector<1x1x2x128xi32> to vector<2x128xi32>
    %c0_i32_16 = arith.constant 0 : i32
    %28 = vector.broadcast %c0_i32_16 : i32 to vector<2x128xi32>
    %29 = arith.cmpi ne, %27, %28 : vector<2x128xi32>
    %cst_17 = arith.constant 0.000000e+00 : f32
    %30 = vector.broadcast %cst_17 : f32 to vector<2x128xf32>
    %31 = arith.maximumf %25, %30 : vector<2x128xf32>
    %cst_18 = arith.constant 1.000000e+00 : f32
    %32 = vector.broadcast %cst_18 : f32 to vector<2x128xf32>
    %33 = arith.subf %32, %25 : vector<2x128xf32>
    %34 = arith.select %29, %31, %33 : vector<2x128xi1>, vector<2x128xf32>
    %c0_19 = arith.constant 0 : index
    %c0_20 = arith.constant 0 : index
    %35 = vector.load %arg6[%c0_19, %c0_20] : memref<2x128xf32, #tpu.memory_space<vmem>>, vector<2x128xf32>
    %36 = arith.addf %35, %34 : vector<2x128xf32>
    %c0_21 = arith.constant 0 : index
    %c0_22 = arith.constant 0 : index
    %37 = vector.load %arg6[%c0_21, %c0_22] : memref<2x128xf32, #tpu.memory_space<vmem>>, vector<2x128xf32>
    tpu.vector_store %arg6[%c0_21, %c0_22], %36 {strides = array<i32>} : memref<2x128xf32, #tpu.memory_space<vmem>>, vector<2x128xf32>,
    %c0_i32_23 = arith.constant 0 : i32
    %38 = arith.cmpi eq, %arg1, %c0_i32_23 : i32
    %39 = arith.extui %38 : i1 to i32
    %c0_i32_24 = arith.constant 0 : i32
    %40 = arith.cmpi ne, %39, %c0_i32_24 : i32
    scf.if %40 {
      %c0_25 = arith.constant 0 : index
      %c0_26 = arith.constant 0 : index
      %41 = vector.load %arg6[%c0_25, %c0_26] : memref<2x128xf32, #tpu.memory_space<vmem>>, vector<2x128xf32>
      %42 = vector.shape_cast %41 : vector<2x128xf32> to vector<1x2x128xf32>
      %cst_27 = arith.constant dense<0.000000e+00> : vector<1xf32>
      %43 = vector.multi_reduction <add>, %42, %cst_27 [1, 2] : vector<1x2x128xf32> to vector<1xf32>
      %44 = vector.shape_cast %43 : vector<1xf32> to vector<1x1x1xf32>
      %45 = vector.extract %44[0, 0, 0] : f32 from vector<1x1x1xf32>
      %46 = vector.broadcast %45 : f32 to vector<1x1x128xf32>
      %c0_28 = arith.constant 0 : index
      %c0_29 = arith.constant 0 : index
      %c0_30 = arith.constant 0 : index
      %47 = vector.load %arg5[%c0_28, %c0_29, %c0_30] : memref<1x1x128xf32, #tpu.memory_space<vmem>>, vector<1x1x128xf32>
      tpu.vector_store %arg5[%c0_28, %c0_29, %c0_30], %46 {strides = array<i32>} : memref<1x1x128xf32, #tpu.memory_space<vmem>>, vector<1x1x128xf32>,
    } else {
    }
    return
  }
  func.func @transform_0(%arg0: i32, %arg1: i32) -> (i32, i32, i32, i32) {
    %c0_i32 = arith.constant 0 : i32
    %c0_i32_0 = arith.constant 0 : i32
    %c0_i32_1 = arith.constant 0 : i32
    return %arg0, %c0_i32, %arg1, %c0_i32_0 : i32, i32, i32, i32
  }
  func.func @transform_1(%arg0: i32, %arg1: i32) -> (i32, i32, i32, i32) {
    %c0_i32 = arith.constant 0 : i32
    %c0_i32_0 = arith.constant 0 : i32
    %c0_i32_1 = arith.constant 0 : i32
    return %arg0, %c0_i32, %arg1, %c0_i32_0 : i32, i32, i32, i32
  }
  func.func @transform_2(%arg0: i32, %arg1: i32) -> (i32, i32, i32, i32) {
    %c0_i32 = arith.constant 0 : i32
    %c0_i32_0 = arith.constant 0 : i32
    %c0_i32_1 = arith.constant 0 : i32
    return %arg0, %c0_i32, %arg1, %c0_i32_0 : i32, i32, i32, i32
  }
  func.func @transform_3(%arg0: i32, %arg1: i32) -> (i32, i32, i32) {
    %c0_i32 = arith.constant 0 : i32
    %c0_i32_0 = arith.constant 0 : i32
    %c0_i32_1 = arith.constant 0 : i32
    return %arg0, %c0_i32, %c0_i32_0 : i32, i32, i32
  }
}

</mosaic_0001>

<llo_original>
// kernel: change_similarity.1
$region0: #{change_similarity.1}
  #allocation0 [shape = 'u32[]', space=smem, size = 0x4, offset = 0x4, fixed_abs, tag = 'smem constant byte address 0x4 - core index']
  #allocation1 [shape = 'u32[144,128]{1,0:T(1,128)}', space=vmem, size = 0x12000, scoped, tag = 'internal scratch']
  #allocation2 [shape = 'f32[2,128]{1,0:T(2,128)}', space=vmem, size = 0x400, scoped, tag = 'scratch operand']
  %s0 = inlined_call_operand.vmem [shape: f32[2,4,2,128], index: 0, kind: input, shape index: {}]
  %s1 = inlined_call_operand.vmem [shape: f32[2,4,2,128], index: 1, kind: input, shape index: {}]
  %s2 = inlined_call_operand.vmem [shape: s32[2,1,2,128], index: 2, kind: input, shape index: {}]
  %s3 = inlined_call_operand.vmem [shape: f32[2,1,128], index: 3, kind: output, shape index: {}]
  %s4 = sld [smem:[#allocation0]]
  $region53: #{change_similarity.1} parent=0
    _
  %s6 = ssub.s32 1, %s4
  %s7 = scalar_select 0, %s6, %s4
  loop: start=0, step=1, limit=4
  $region2: #{change_similarity.1} parent=0 // loop_pre_header
    _
  $region3: #{change_similarity.1} parent=0 // loop_header
    %s9 = sphi 0, %s13
    %p10 = scmp.ge.s32.totalorder %s9, 4
    %s16 = sphi 0, %s28
    %s17 = sphi 0, %s24
    %s18 = sphi 0, %s16
    %s19 = sphi 0, %s17
    %s20 = sphi 0, %s18
    %s21 = sphi 0, %s19
    %s33 = sphi 0, %s35
    %s36 = sphi 0, %s33
    %s37 = sphi 0, %s36
    %s53 = sphi 0, %s37
    %s61 = sphi 0, %s63
    %s64 = sphi 0, %s61
    %s65 = sphi 0, %s64
    %s81 = sphi 0, %s65
    %s89 = sphi 0, %s91
    %s92 = sphi 0, %s89
    %s93 = sphi 0, %s92
    %s109 = sphi 0, %s93
    %s115 = sphi 0, %s117
    %s118 = sphi 0, %s115
    %s119 = sphi 0, %s118
    %s135 = sphi 0, %s119
  $region4: #{change_similarity.1} parent=0 // loop_header_branch
    %12 = sbr.rel (%p10) target = $region8
  $region5: #{change_similarity.1} parent=0 // loop_body
    %s14 = ssub.s32 %s9, 1
    %s15 = ssub.s32 %s9, 2
    %s22 = sadd.s32 1, %s17
    %p23 = scmp.ge.s32.totalorder %s22, 1
    %s24 = scalar_select %p23, 0, %s22
    %s25 = sadd.s32 1, %s16
    %s26 = scalar_select %p23, %s25, %s16
    %p27 = scmp.ge.s32.totalorder %s26, 2
    %s28 = scalar_select %p27, 0, %s26
    %s29 = ssub.s32 %s16, %s28
    %s30 = ssub.s32 %s17, %s24
    %s31 = sor.u32 %s29, %s30
    %p32 = scmp.eq.s32.totalorder %s31, 0
    %s34 = sadd.s32 %s33, 1
    %s35 = scalar_select %p32, %s33, %s34
    %p38 = pneg %p32
    %p39 = scmp.eq.s32.totalorder %s9, 1
    %p40 = por %p38, %p39
    %p41 = scmp.ne.s32.totalorder %s33, %s36
    %p42 = scmp.eq.s32.totalorder %s9, 0
    %p43 = por %p41, %p42
    %p44 = scmp.ne.s32.totalorder %s33, %s36
    %p45 = scmp.eq.s32.totalorder %s14, 1
    %p46 = por %p44, %p45
    %p47 = scmp.ne.s32.totalorder %s36, %s37
    %p48 = scmp.eq.s32.totalorder %s14, 0
    %p49 = por %p47, %p48
    %p50 = scmp.ne.s32.totalorder %s36, %s37
    %p51 = scmp.eq.s32.totalorder %s15, 1
    %p52 = por %p50, %p51
    %p54 = scmp.ne.s32.totalorder %s37, %s53
    %p55 = scmp.eq.s32.totalorder %s15, 0
    %p56 = por %p54, %p55
    %s57 = ssub.s32 %s16, %s28
    %s58 = ssub.s32 %s17, %s24
    %s59 = sor.u32 %s57, %s58
    %p60 = scmp.eq.s32.totalorder %s59, 0
    %s62 = sadd.s32 %s61, 1
    %s63 = scalar_select %p60, %s61, %s62
    %p66 = pneg %p60
    %p67 = scmp.eq.s32.totalorder %s9, 1
    %p68 = por %p66, %p67
    %p69 = scmp.ne.s32.totalorder %s61, %s64
    %p70 = scmp.eq.s32.totalorder %s9, 0
    %p71 = por %p69, %p70
    %p72 = scmp.ne.s32.totalorder %s61, %s64
    %p73 = scmp.eq.s32.totalorder %s14, 1
    %p74 = por %p72, %p73
    %p75 = scmp.ne.s32.totalorder %s64, %s65
    %p76 = scmp.eq.s32.totalorder %s14, 0
    %p77 = por %p75, %p76
    %p78 = scmp.ne.s32.totalorder %s64, %s65
    %p79 = scmp.eq.s32.totalorder %s15, 1
    %p80 = por %p78, %p79
    %p82 = scmp.ne.s32.totalorder %s65, %s81
    %p83 = scmp.eq.s32.totalorder %s15, 0
    %p84 = por %p82, %p83
    %s85 = ssub.s32 %s16, %s28
    %s86 = ssub.s32 %s17, %s24
    %s87 = sor.u32 %s85, %s86
    %p88 = scmp.eq.s32.totalorder %s87, 0
    %s90 = sadd.s32 %s89, 1
    %s91 = scalar_select %p88, %s89, %s90
    %p94 = pneg %p88
    %p95 = scmp.eq.s32.totalorder %s9, 1
    %p96 = por %p94, %p95
    %p97 = scmp.ne.s32.totalorder %s89, %s92
    %p98 = scmp.eq.s32.totalorder %s9, 0
    %p99 = por %p97, %p98
    %p100 = scmp.ne.s32.totalorder %s89, %s92
    %p101 = scmp.eq.s32.totalorder %s14, 1
    %p102 = por %p100, %p101
    %p103 = scmp.ne.s32.totalorder %s92, %s93
    %p104 = scmp.eq.s32.totalorder %s14, 0
    %p105 = por %p103, %p104
    %p106 = scmp.ne.s32.totalorder %s92, %s93
    %p107 = scmp.eq.s32.totalorder %s15, 1
    %p108 = por %p106, %p107
    %p110 = scmp.ne.s32.totalorder %s93, %s109
    %p111 = scmp.eq.s32.totalorder %s15, 0
    %p112 = por %p110, %p111
    %s113 = ssub.s32 %s16, %s28
    %p114 = scmp.eq.s32.totalorder %s113, 0
    %s116 = sadd.s32 %s115, 1
    %s117 = scalar_select %p114, %s115, %s116
    %p120 = pneg %p114
    %p121 = scmp.eq.s32.totalorder %s9, 1
    %p122 = por %p120, %p121
    %p123 = scmp.ne.s32.totalorder %s115, %s118
    %p124 = scmp.eq.s32.totalorder %s9, 0
    %p125 = por %p123, %p124
    %p126 = scmp.ne.s32.totalorder %s115, %s118
    %p127 = scmp.eq.s32.totalorder %s14, 1
    %p128 = por %p126, %p127
    %p129 = scmp.ne.s32.totalorder %s118, %s119
    %p130 = scmp.eq.s32.totalorder %s14, 0
    %p131 = por %p129, %p130
    %p132 = scmp.ne.s32.totalorder %s118, %s119
    %p133 = scmp.eq.s32.totalorder %s15, 1
    %p134 = por %p132, %p133
    %p136 = scmp.ne.s32.totalorder %s119, %s135
    %p137 = scmp.eq.s32.totalorder %s15, 0
    %p138 = por %p136, %p137
    %p139 = scmp.le.s32.totalorder 1, %s9
    %p140 = scmp.lt.s32.totalorder %s9, 3
    %p141 = pnand %p139, %p140
    %p142 = pneg %p141
    // Predicated region
    $region9: #{change_similarity.1} parent=5 // pred_check
      _
    $region10: #{change_similarity.1} parent=5 // pred_check_branch
      %144 = sbr.rel (%p141) target = $region12
    $region11: #{change_similarity.1} parent=5 // pred_region
      %s145 = ssub.s32 %s9, 1
    $region12: #{change_similarity.1} parent=5 // pred_fallthru
      _
    %p146 = scmp.lt.s32.totalorder %s9, 2
    // Predicated region
    $region13: #{change_similarity.1} parent=5 // pred_check
      %p147 = pneg %p146
    $region14: #{change_similarity.1} parent=5 // pred_check_branch
      %149 = sbr.rel (%p147) target = $region16
    $region15: #{change_similarity.1} parent=5 // pred_region
      // Predicated region
      $region17: #{change_similarity.1} parent=15 // pred_check
        %p150 = pneg %p43
      $region18: #{change_similarity.1} parent=15 // pred_check_branch
        %152 = sbr.rel (%p150) target = $region20
      $region19: #{change_similarity.1} parent=15 // pred_region
        %p153 = scmp.lt.s32.totalorder %s16, 1
        %s154 = scalar_select %p153, %s16, 1
        %p155 = scmp.lt.s32.totalorder %s17, 0
        %s156 = scalar_select %p155, %s17, 0
        %s157 = smul.addr %s154, 4
        %s158 = sadd.s32 %s156, %s157
        %s159 = smul.addr %s158, 2
        %s160 = scalar_lea.vmem %s0, %s159
      $region20: #{change_similarity.1} parent=15 // pred_fallthru
        _
      // Predicated region
      $region21: #{change_similarity.1} parent=15 // pred_check
        %p161 = pneg %p71
      $region22: #{change_similarity.1} parent=15 // pred_check_branch
        %163 = sbr.rel (%p161) target = $region24
      $region23: #{change_similarity.1} parent=15 // pred_region
        %p164 = scmp.lt.s32.totalorder %s16, 1
        %s165 = scalar_select %p164, %s16, 1
        %p166 = scmp.lt.s32.totalorder %s17, 0
        %s167 = scalar_select %p166, %s17, 0
        %s168 = smul.addr %s165, 4
        %s169 = sadd.s32 %s167, %s168
        %s170 = smul.addr %s169, 2
        %s171 = scalar_lea.vmem %s1, %s170
      $region24: #{change_similarity.1} parent=15 // pred_fallthru
        _
      // Predicated region
      $region25: #{change_similarity.1} parent=15 // pred_check
        %p172 = pneg %p99
      $region26: #{change_similarity.1} parent=15 // pred_check_branch
        %174 = sbr.rel (%p172) target = $region28
      $region27: #{change_similarity.1} parent=15 // pred_region
        %p175 = scmp.lt.s32.totalorder %s16, 1
        %s176 = scalar_select %p175, %s16, 1
        %p177 = scmp.lt.s32.totalorder %s17, 0
        %s178 = scalar_select %p177, %s17, 0
        %s179 = sadd.s32 %s178, %s176
        %s180 = smul.addr %s179, 2
        %s181 = scalar_lea.vmem %s2, %s180
      $region28: #{change_similarity.1} parent=15 // pred_fallthru
        _
    $region16: #{change_similarity.1} parent=5 // pred_fallthru
      _
    %p182 = scmp.le.s32.totalorder 1, %s9
    %p183 = scmp.lt.s32.totalorder %s9, 3
    %p184 = pnand %p182, %p183
    %p185 = pneg %p184
    // Predicated region
    $region29: #{change_similarity.1} parent=5 // pred_check
      _
    $region30: #{change_similarity.1} parent=5 // pred_check_branch
      %187 = sbr.rel (%p184) target = $region32
    $region31: #{change_similarity.1} parent=5 // pred_region
      %s188 = ssub.s32 %s9, 1
      %p189 = scmp.lt.s32.totalorder %s18, 1
      %s190 = scalar_select %p189, %s18, 1
      %p191 = scmp.lt.s32.totalorder %s19, 0
      %s192 = scalar_select %p191, %s19, 0
      %s193 = smul.addr %s190, 4
      %s194 = sadd.s32 %s192, %s193
      %s195 = smul.addr %s194, 2
      %s196 = scalar_lea.vmem %s0, %s195
      %p197 = pneg %p49
      %p198 = pneg %p46
      %p199 = scmp.lt.s32.totalorder %s18, 1
      %s200 = scalar_select %p199, %s18, 1
      %p201 = scmp.lt.s32.totalorder %s19, 0
      %s202 = scalar_select %p201, %s19, 0
      %s203 = smul.addr %s200, 4
      %s204 = sadd.s32 %s202, %s203
      %s205 = smul.addr %s204, 2
      %s206 = scalar_lea.vmem %s1, %s205
      %p207 = pneg %p77
      %p208 = pneg %p74
      %p209 = scmp.lt.s32.totalorder %s18, 1
      %s210 = scalar_select %p209, %s18, 1
      %p211 = scmp.lt.s32.totalorder %s19, 0
      %s212 = scalar_select %p211, %s19, 0
      %s213 = sadd.s32 %s212, %s210
      %s214 = smul.addr %s213, 2
      %s215 = scalar_lea.vmem %s2, %s214
      %p216 = pneg %p105
      %p217 = pneg %p102
      %p218 = pneg %p131
      %p219 = pneg %p128
      %p220 = scmp.lt.s32.totalorder %s18, 1
      %s221 = scalar_select %p220, %s18, 1
      %s222 = scalar_lea.vmem %s3, %s221
      %p223 = scmp.lt.s32.totalorder %s18, 1
      %s224 = scalar_select %p223, %s18, 1
      %p225 = scmp.lt.s32.totalorder %s19, 0
      %s226 = scalar_select %p225, %s19, 0
      %s227 = smul.addr %s224, 4
      %s228 = sadd.s32 %s226, %s227
      %s229 = smul.addr %s228, 2
      %s230 = scalar_lea.vmem %s0, %s229
      %p231 = scmp.lt.s32.totalorder %s18, 1
      %s232 = scalar_select %p231, %s18, 1
      %p233 = scmp.lt.s32.totalorder %s19, 0
      %s234 = scalar_select %p233, %s19, 0
      %s235 = smul.addr %s232, 4
      %s236 = sadd.s32 %s234, %s235
      %s237 = smul.addr %s236, 2
      %s238 = scalar_lea.vmem %s1, %s237
      %p239 = scmp.lt.s32.totalorder %s18, 1
      %s240 = scalar_select %p239, %s18, 1
      %p241 = scmp.lt.s32.totalorder %s19, 0
      %s242 = scalar_select %p241, %s19, 0
      %s243 = sadd.s32 %s242, %s240
      %s244 = smul.addr %s243, 2
      %s245 = scalar_lea.vmem %s2, %s244
      %p246 = scmp.lt.s32.totalorder %s18, 1
      %s247 = scalar_select %p246, %s18, 1
      %s248 = scalar_lea.vmem %s3, %s247
      %p249 = scmp.eq.s32.totalorder %s19, 0
      // Predicated region
      $region33: #{change_similarity.1} parent=31 // pred_check
        %p250 = pneg %p249
      $region34: #{change_similarity.1} parent=31 // pred_check_branch
        %252 = sbr.rel (%p250) target = $region36
      $region35: #{change_similarity.1} parent=31 // pred_region
        %253 = vst [vmem:[#allocation2] sm:$0x3] 0.0
      $region36: #{change_similarity.1} parent=31 // pred_fallthru
        _
      %v254 = vld [vmem:[%s230] sm:$0x3]
      %v255 = vld [vmem:[%s230 + $0x2] sm:$0x3]
      %v256 = vld [vmem:[%s230 + $0x4] sm:$0x3]
      %v257 = vld [vmem:[%s230 + $0x6] sm:$0x3]
      %v258 = vld [vmem:[%s238] sm:$0x3]
      %v259 = vld [vmem:[%s238 + $0x2] sm:$0x3]
      %v260 = vld [vmem:[%s238 + $0x4] sm:$0x3]
      %v261 = vld [vmem:[%s238 + $0x6] sm:$0x3]
      %vm262 = vcmask 1041408
      %v263 = vsel %vm262, %v254, -inf
      %v264 = vsel %vm262, %v255, -inf
      %v265 = vsel %vm262, %v256, -inf
      %v266 = vsel %vm262, %v257, -inf
      %v267 = vmax.f32 %v263, %v264
      %v268 = vmax.f32 %v265, %v266
      %v269 = vmax.f32 %v267, %v268
      %v270 = vsub.f32 %v254, %v269
      %v271 = vsub.f32 %v255, %v269
      %v272 = vsub.f32 %v256, %v269
      %v273 = vsub.f32 %v257, %v269
      %v274 = vmul.f32 %v270, 1.442695
      %v275 = vpow.pop %v274
      %v276 = vmul.f32 %v271, 1.442695
      %v277 = vpow.pop %v276
      %v278 = vmul.f32 %v272, 1.442695
      %v279 = vpow.pop %v278
      %v280 = vmul.f32 %v273, 1.442695
      %v281 = vpow.pop %v280
      %v282 = vsel %vm262, %v258, -inf
      %v283 = vsel %vm262, %v259, -inf
      %v284 = vsel %vm262, %v260, -inf
      %v285 = vsel %vm262, %v261, -inf
      %v286 = vmax.f32 %v282, %v283
      %v287 = vmax.f32 %v284, %v285
      %v288 = vmax.f32 %v286, %v287
      %v289 = vsub.f32 %v258, %v288
      %v290 = vsub.f32 %v259, %v288
      %v291 = vsub.f32 %v260, %v288
      %v292 = vsub.f32 %v261, %v288
      %v293 = vmul.f32 %v289, 1.442695
      %v294 = vpow.pop %v293
      %v295 = vmul.f32 %v290, 1.442695
      %v296 = vpow.pop %v295
      %v297 = vmul.f32 %v291, 1.442695
      %v298 = vpow.pop %v297
      %v299 = vmul.f32 %v292, 1.442695
      %v300 = vpow.pop %v299
      %v301 = vmul.f32 %v275, %v294
      %v302 = vmul.f32 %v277, %v296
      %v303 = vmul.f32 %v279, %v298
      %v304 = vmul.f32 %v281, %v300
      %v305 = vsel %vm262, %v301, 0.0
      %v306 = vsel %vm262, %v302, 0.0
      %v307 = vadd.f32 %v305, %v306
      %v308 = vsel %vm262, %v303, 0.0
      %v309 = vadd.f32 %v307, %v308
      %v310 = vsel %vm262, %v304, 0.0
      %v311 = vadd.f32 %v309, %v310
      %v312 = vmul.f32 %v275, %v275
      %v313 = vmul.f32 %v277, %v277
      %v314 = vmul.f32 %v279, %v279
      %v315 = vmul.f32 %v281, %v281
      %v316 = vsel %vm262, %v312, 0.0
      %v317 = vsel %vm262, %v313, 0.0
      %v318 = vadd.f32 %v316, %v317
      %v319 = vsel %vm262, %v314, 0.0
      %v320 = vadd.f32 %v318, %v319
      %v321 = vsel %vm262, %v315, 0.0
      %v322 = vadd.f32 %v320, %v321
      %v323 = vmul.f32 %v294, %v294
      %v324 = vmul.f32 %v296, %v296
      %v325 = vmul.f32 %v298, %v298
      %v326 = vmul.f32 %v300, %v300
      %v327 = vsel %vm262, %v323, 0.0
      %v328 = vsel %vm262, %v324, 0.0
      %v329 = vadd.f32 %v327, %v328
      %v330 = vsel %vm262, %v325, 0.0
      %v331 = vadd.f32 %v329, %v330
      %v332 = vsel %vm262, %v326, 0.0
      %v333 = vadd.f32 %v331, %v332
      %v334 = vmul.f32 %v322, %v333
      %v335 = vrsqrt.pop %v334
      %v336 = vmul.f32 %v311, %v335
      %v337 = vld [vmem:[%s245] sm:$0x3]
      %vm338 = vcmp.ne.s32.totalorder %v337, 0
      %v339 = vmax.f32 %v336, 0.0
      %v340 = vsub.f32 1.0, %v336
      %v341 = vsel %vm338, %v339, %v340
      %v342 = vld [vmem:[#allocation2] sm:$0x3]
      %v343 = vadd.f32 %v342, %v341
      %344 = vst [vmem:[#allocation2] sm:$0x3] %v343
      // Predicated region
      $region37: #{change_similarity.1} parent=31 // pred_check
        %p345 = pneg %p249
      $region38: #{change_similarity.1} parent=31 // pred_check_branch
        %347 = sbr.rel (%p345) target = $region40
      $region39: #{change_similarity.1} parent=31 // pred_region
        %v348 = vld [vmem:[#allocation2] sm:$0x3]
        %v349 = vsel %vm262, %v348, 0.0
        %350 = vadd.xlane.f32.xlu0 %v349
        %v351 = vpop.xlane.xlu0 %350
        %v352 = vrot.slane %v351, 4
        %v353 = vadd.f32 %v351, %v352
        %v354 = vrot.slane %v353, 2
        %v355 = vadd.f32 %v353, %v354
        %v356 = vrot.slane %v355, 1
        %v357 = vadd.f32 %v355, %v356
        %s358 = vtos %v357
        %v359 = vstv %s358
        %360 = vst [vmem:[%s248] sm:$0x1] %v359
      $region40: #{change_similarity.1} parent=31 // pred_fallthru
        _
      %p361 = scmp.lt.s32.totalorder %s18, 1
      %s362 = scalar_select %p361, %s18, 1
      %s363 = scalar_lea.vmem %s3, %s362
      // Predicated region
      $region41: #{change_similarity.1} parent=31 // pred_check
        %p364 = pneg %p128
      $region42: #{change_similarity.1} parent=31 // pred_check_branch
        %366 = sbr.rel (%p364) target = $region44
      $region43: #{change_similarity.1} parent=31 // pred_region
        _
      $region44: #{change_similarity.1} parent=31 // pred_fallthru
        _
    $region32: #{change_similarity.1} parent=5 // pred_fallthru
      _
    %p367 = scmp.le.s32.totalorder 2, %s9
    // Predicated region
    $region45: #{change_similarity.1} parent=5 // pred_check
      %p368 = pneg %p367
    $region46: #{change_similarity.1} parent=5 // pred_check_branch
      %370 = sbr.rel (%p368) target = $region48
    $region47: #{change_similarity.1} parent=5 // pred_region
      %s371 = ssub.s32 %s9, 2
      // Predicated region
      $region49: #{change_similarity.1} parent=47 // pred_check
        %p372 = pneg %p134
      $region50: #{change_similarity.1} parent=47 // pred_check_branch
        %374 = sbr.rel (%p372) target = $region52
      $region51: #{change_similarity.1} parent=47 // pred_region
        %p375 = scmp.lt.s32.totalorder %s20, 1
        %s376 = scalar_select %p375, %s20, 1
        %s377 = scalar_lea.vmem %s3, %s376
      $region52: #{change_similarity.1} parent=47 // pred_fallthru
        _
    $region48: #{change_similarity.1} parent=5 // pred_fallthru
      _
  $region6: #{change_similarity.1} parent=0 // loop_footer
    %s13 = sadd.s32 1, %s9
  $region7: #{change_similarity.1} parent=0 // loop_footer_branch
    %8 = sbr.rel target = $region3
  $region8: #{change_similarity.1} parent=0 // loop_exit
    _

</llo_original>
